<compile_context>
chip_gen: v7x
topology: tpu7x:2x2x1
jax: 0.10.0
libtpu: 0.0.40
codegen_flags: <defaults>
</compile_context>

<pallas_src>
import functools

import numpy as np
import jax
import jax.numpy as jnp
from jax.experimental import pallas as pl
from jax.experimental.pallas import tpu as pltpu

SQRT2 = float(np.sqrt(2.0))
LRELU_SLOPE = 0.2
NUM_CLASSES = 64          # nn.Embedding(64, 512) in the reference module
CLASS_PAD = 128           # pad class axis to an MXU-friendly K


def _round_up(x, m):
    return ((x + m - 1) // m) * m


# ----------------------------------------------------------------------------
# Fused mapping-network kernel
# ----------------------------------------------------------------------------
def _mapping_kernel(z_ref, c_ref, tbl_ref, w0z_ref, w0y_ref, b0_ref, *rest,
                    num_extra, z_dim, w_dim, mxu_dtype):
    """rest = [w_i, b_i] * num_extra + [out].

    Padded lanes of every weight/bias are zero, so padded activation lanes
    stay exactly zero through the whole network; pixel-norm means divide by
    the TRUE feature counts (z_dim / w_dim), not the padded ones.
    Rows of a partial last batch tile are garbage but fully row-independent
    (pixel-norm + matmul M axis), and Pallas clips their output writes.
    """
    fc_refs = rest[:2 * num_extra]
    o_ref = rest[2 * num_extra]

    # ---- pixel-norm(z) (f32 elementwise) ----
    z = z_ref[...].astype(jnp.float32)
    x = z * jax.lax.rsqrt(jnp.sum(z * z, axis=-1, keepdims=True) * (1.0 / z_dim)
                          + 1e-8)

    # ---- in-kernel class embedding: one-hot @ folded (embed o c_emb) table ----
    c = c_ref[...]                                                   # (tm, 1) int32
    iota = jax.lax.broadcasted_iota(jnp.int32, (c.shape[0], tbl_ref.shape[0]), 1)
    onehot = (iota == c).astype(jnp.float32)                         # (tm, 128)
    y = jnp.dot(onehot, tbl_ref[...], preferred_element_type=jnp.float32)
    # ---- pixel-norm(y) ----
    y = y * jax.lax.rsqrt(jnp.sum(y * y, axis=-1, keepdims=True) * (1.0 / w_dim)
                          + 1e-8)

    # ---- fc0 on concat([x, y]) expressed as a split matmul (no lane concat) ----
    h = (jnp.dot(x.astype(mxu_dtype), w0z_ref[...],
                 preferred_element_type=jnp.float32)
         + jnp.dot(y.astype(mxu_dtype), w0y_ref[...],
                   preferred_element_type=jnp.float32)
         + b0_ref[...])
    h = jnp.maximum(h, LRELU_SLOPE * h)        # lrelu; sqrt(2) gain folded offline

    # ---- remaining fc layers ----
    for i in range(num_extra):
        w_ref = fc_refs[2 * i]
        b_ref = fc_refs[2 * i + 1]
        h = jnp.dot(h.astype(mxu_dtype), w_ref[...],
                    preferred_element_type=jnp.float32) + b_ref[...]
        h = jnp.maximum(h, LRELU_SLOPE * h)

    o_ref[...] = h


def _pick_batch_tile(n, max_tile=512):
    """Batch tile: big (amortize per-step overhead), multiple of 8, and >=2
    grid tiles whenever we have the rows (v7x megacore)."""
    if n <= 16:
        return n                      # full-dim block (allowed even if not %8)
    if n <= max_tile:
        half = _round_up((n + 1) // 2, 8)
        return min(half, max_tile)
    return max_tile


def fused_mapping(z_padded, c_idx, prep):
    """One pallas_call over the whole mapping net. Returns (N, w_pad) f32."""
    N, z_pad = z_padded.shape
    w_pad = prep["w_pad"]
    extra = prep["extra"]
    num_extra = len(extra)
    mxu_dtype = prep["mxu_dtype"]

    tm = _pick_batch_tile(N)
    grid = (pl.cdiv(N, tm),)

    row_map = lambda i: (i, 0)       # batch-tiled operands
    const_map = lambda i: (0, 0)     # VMEM-resident constants (no re-DMA)

    in_specs = [
        pl.BlockSpec((tm, z_pad), row_map),
        pl.BlockSpec((tm, 1), row_map),
        pl.BlockSpec((CLASS_PAD, w_pad), const_map),
        pl.BlockSpec((z_pad, w_pad), const_map),
        pl.BlockSpec((w_pad, w_pad), const_map),
        pl.BlockSpec((1, w_pad), const_map),
    ]
    operands = [z_padded, c_idx, prep["table"], prep["w0z"], prep["w0y"],
                prep["b0"]]
    for (w_i, b_i) in extra:
        in_specs += [pl.BlockSpec((w_pad, w_pad), const_map),
                     pl.BlockSpec((1, w_pad), const_map)]
        operands += [w_i, b_i]

    kern = functools.partial(_mapping_kernel,
                             num_extra=num_extra,
                             z_dim=prep["z_dim"],
                             w_dim=prep["w_dim"],
                             mxu_dtype=mxu_dtype)

    # Explicit scoped-VMEM budget: resident constants (double-buffered by
    # default) + batch-tiled I/O double buffers + headroom.  Clamped to the
    # smallest physical VMEM across generations (v7x: 64 MiB).
    const_bytes = sum(int(a.size) * a.dtype.itemsize for a in operands[2:])
    io_bytes = (tm * z_pad * 4) + (tm * 4) + (tm * w_pad * 4)
    needed = 2 * const_bytes + 2 * io_bytes + 4 * tm * w_pad * 4 + (8 << 20)
    vmem_limit = int(min(64 << 20, max(32 << 20, needed)))

    return pl.pallas_call(
        kern,
        grid=grid,
        in_specs=in_specs,
        out_specs=pl.BlockSpec((tm, w_pad), row_map),
        out_shape=jax.ShapeDtypeStruct((N, w_pad), jnp.float32),
        compiler_params=pltpu.CompilerParams(
            dimension_semantics=("parallel",),      # megacore across batch tiles
            vmem_limit_bytes=vmem_limit),
    )(*operands)


# ----------------------------------------------------------------------------
# Parameter init (matches the torch module's initialization semantics)
# ----------------------------------------------------------------------------
def init_fc(key, in_f, out_f, activation="linear", lr_multiplier=1.0,
            weight_init=1.0, bias_init=0.0):
    w = jax.random.normal(key, (out_f, in_f), jnp.float32) * (weight_init / lr_multiplier)
    b = np.broadcast_to(np.asarray(bias_init, np.float32), [out_f]) / lr_multiplier
    return dict(weight=w, bias=jnp.asarray(b, jnp.float32),
                weight_gain=float(lr_multiplier / np.sqrt(in_f)),
                bias_gain=float(lr_multiplier), activation=activation)


def init_mapping(key, z_dim, w_dim, num_ws, num_layers=2, lr_multiplier=0.01,
                 w_avg_beta=0.998):
    c_dim = 512                          # fixed in the reference module
    ks = jax.random.split(key, num_layers + 2)
    c_emb = jax.random.normal(ks[0], (NUM_CLASSES, c_dim), jnp.float32)
    embed = init_fc(ks[1], c_dim, w_dim)
    features = [z_dim + w_dim] + [w_dim] * num_layers
    fcs = [init_fc(ks[2 + i], features[i], features[i + 1], activation="lrelu",
                   lr_multiplier=lr_multiplier) for i in range(num_layers)]
    return dict(z_dim=z_dim, c_dim=c_dim, w_dim=w_dim, num_ws=num_ws,
                num_layers=num_layers, c_emb=c_emb, embed=embed, fcs=fcs,
                w_avg=jnp.zeros((w_dim,), jnp.float32), w_avg_beta=w_avg_beta)


# ----------------------------------------------------------------------------
# One-time parameter prep (hoisted out of the forward pass)
# ----------------------------------------------------------------------------
def prepare_mapping_params(params, mxu_dtype=jnp.bfloat16):
    z_dim, w_dim = params["z_dim"], params["w_dim"]
    z_pad = _round_up(z_dim, 128)
    w_pad = _round_up(w_dim, 128)

    # Fold the `embed` FC through the class-embedding table:
    # embed(c_emb[c]) == (c_emb @ W_e^T * gain + b_e)[c]  (exact).
    we = params["embed"]["weight"].T * params["embed"]["weight_gain"]   # (c_dim, w_dim)
    be = params["embed"]["bias"] * params["embed"]["bias_gain"]
    table = params["c_emb"] @ we + be[None, :]                          # (64, w_dim) f32
    table = jnp.zeros((CLASS_PAD, w_pad), jnp.float32).at[:NUM_CLASSES, :w_dim].set(table)

    # fc0: fold weight_gain and the lrelu sqrt(2) gain (lrelu is positively
    # homogeneous, so lrelu(a)*g == lrelu(g*a)) into weight AND bias; split
    # into z-part / y-part so the concat becomes two matmuls; zero-pad.
    fc0 = params["fcs"][0]
    w0 = fc0["weight"].T * (fc0["weight_gain"] * SQRT2)                 # (z+w, w_dim)
    b0 = fc0["bias"] * (fc0["bias_gain"] * SQRT2)
    w0z = (jnp.zeros((z_pad, w_pad), jnp.float32)
           .at[:z_dim, :w_dim].set(w0[:z_dim])).astype(mxu_dtype)
    w0y = (jnp.zeros((w_pad, w_pad), jnp.float32)
           .at[:w_dim, :w_dim].set(w0[z_dim:])).astype(mxu_dtype)
    b0p = jnp.zeros((1, w_pad), jnp.float32).at[0, :w_dim].set(b0)

    extra = []
    for fc in params["fcs"][1:]:
        w = fc["weight"].T * (fc["weight_gain"] * SQRT2)
        b = fc["bias"] * (fc["bias_gain"] * SQRT2)
        wp = (jnp.zeros((w_pad, w_pad), jnp.float32)
              .at[:w_dim, :w_dim].set(w)).astype(mxu_dtype)
        bp = jnp.zeros((1, w_pad), jnp.float32).at[0, :w_dim].set(b)
        extra.append((wp, bp))

    return dict(z_dim=z_dim, w_dim=w_dim, z_pad=z_pad, w_pad=w_pad,
                num_ws=params["num_ws"], table=table, w0z=w0z, w0y=w0y,
                b0=b0p, extra=extra, w_avg=params["w_avg"],
                mxu_dtype=mxu_dtype)


# ----------------------------------------------------------------------------
# MappingNetwork forward
# ----------------------------------------------------------------------------
def mapping_forward(prep, z, c, truncation_psi=1, truncation_cutoff=None):
    """z: [N, z_dim] latents; c: [N] int class indices (as in the torch module)."""
    N = z.shape[0]
    z = jnp.asarray(z, jnp.float32)
    if prep["z_pad"] != prep["z_dim"]:
        z = jnp.pad(z, ((0, 0), (0, prep["z_pad"] - prep["z_dim"])))
    c_idx = jnp.asarray(c, jnp.int32).reshape(N, 1)

    w_full = fused_mapping(z, c_idx, prep)                 # (N, w_pad) f32
    w = w_full[:, :prep["w_dim"]]

    # x.unsqueeze(1).repeat([1, num_ws, 1]) -> broadcast (no tile materialization here)
    ws = jnp.broadcast_to(w[:, None, :], (N, prep["num_ws"], prep["w_dim"]))
    if truncation_psi != 1:
        cutoff = prep["num_ws"] if truncation_cutoff is None else truncation_cutoff
        w_avg = prep["w_avg"][None, None, :]
        ws = ws.at[:, :cutoff].set(w_avg + (ws[:, :cutoff] - w_avg) * truncation_psi)
    # TODO(synk): update_emas=True (w_avg EMA buffer update) is a training-time
    # stateful mutation and is not implemented in this inference-only path.
    return ws


# ----------------------------------------------------------------------------
# References for correctness checks
# ----------------------------------------------------------------------------
def mapping_reference_exact(prep, z, c):
    """Same prepped params / dtype path as the kernel (tight tolerance)."""
    z_dim, w_dim = prep["z_dim"], prep["w_dim"]
    mxu = prep["mxu_dtype"]
    x = jnp.asarray(z, jnp.float32)
    x = x * jax.lax.rsqrt(jnp.mean(x * x, axis=1, keepdims=True) + 1e-8)
    y = prep["table"][jnp.asarray(c, jnp.int32), :w_dim]
    y = y * jax.lax.rsqrt(jnp.mean(y * y, axis=1, keepdims=True) + 1e-8)
    h = (jnp.dot(x.astype(mxu), prep["w0z"][:z_dim, :], preferred_element_type=jnp.float32)
         + jnp.dot(y.astype(mxu), prep["w0y"][:w_dim, :], preferred_element_type=jnp.float32)
         + prep["b0"])
    h = jnp.maximum(h, LRELU_SLOPE * h)
    for (wp, bp) in prep["extra"]:
        h = jnp.dot(h.astype(mxu), wp, preferred_element_type=jnp.float32) + bp
        h = jnp.maximum(h, LRELU_SLOPE * h)
    h = h[:, :w_dim]
    return jnp.broadcast_to(h[:, None, :], (h.shape[0], prep["num_ws"], w_dim))


def mapping_reference_f32(params, z, c):
    """Faithful f32 emulation of the torch module (loose tolerance vs bf16 kernel)."""
    c_vec = params["c_emb"][jnp.asarray(c, jnp.int32)]
    x = jnp.asarray(z, jnp.float32)
    x = x * jax.lax.rsqrt(jnp.mean(x * x, axis=1, keepdims=True) + 1e-8)
    we = params["embed"]["weight"].T * params["embed"]["weight_gain"]
    be = params["embed"]["bias"] * params["embed"]["bias_gain"]
    y = c_vec @ we + be[None, :]
    y = y * jax.lax.rsqrt(jnp.mean(y * y, axis=1, keepdims=True) + 1e-8)
    h = jnp.concatenate([x, y], axis=1)
    for fc in params["fcs"]:
        w = fc["weight"].T * fc["weight_gain"]
        b = fc["bias"] * fc["bias_gain"]
        h = h @ w + b[None, :]
        h = jnp.where(h >= 0.0, h, h * LRELU_SLOPE) * SQRT2
    return jnp.broadcast_to(h[:, None, :], (h.shape[0], params["num_ws"], params["w_dim"]))


# ----------------------------------------------------------------------------
if __name__ == "__main__":
    key = jax.random.PRNGKey(0)
    kp, kz, kc = jax.random.split(key, 3)

    Z_DIM, W_DIM, NUM_WS, N = 16, 32, 8, 2
    params = init_mapping(kp, z_dim=Z_DIM, w_dim=W_DIM, num_ws=NUM_WS,
                          num_layers=2, lr_multiplier=0.01)
    prep = prepare_mapping_params(params)          # one-time param prep (hoisted)

    z = jax.random.normal(kz, (N, Z_DIM), jnp.float32)
    clz = jax.random.randint(kc, (N,), 0, NUM_CLASSES)   # class indices

    fwd = jax.jit(lambda z_, c_: mapping_forward(prep, z_, c_))
    ws = jax.block_until_ready(fwd(z, clz))

    assert ws.shape == (N, NUM_WS, W_DIM), ws.shape
    assert ws.dtype == jnp.float32
    assert bool(jnp.isfinite(ws).all())

    ref_exact = jax.block_until_ready(mapping_reference_exact(prep, z, clz))
    err_exact = float(jnp.max(jnp.abs(ws - ref_exact)))
    assert err_exact < 1e-3, f"mismatch vs exact-path reference: {err_exact}"

    ref_f32 = jax.block_until_ready(mapping_reference_f32(params, z, clz))
    err_f32 = float(jnp.max(jnp.abs(ws - ref_f32)))
    assert err_f32 < 5e-2, f"mismatch vs f32 torch-semantics reference: {err_f32}"

    print("KERNEL_OK")
</pallas_src>

<mosaic_0001>
module attributes {stable_mosaic.version = 11 : i64} {
  func.func @_mapping_kernel(%arg0: i32, %arg1: memref<2x128xf32, #tpu.memory_space<vmem>>, %arg2: memref<2x1xi32, #tpu.memory_space<vmem>>, %arg3: memref<128x128xf32, #tpu.memory_space<vmem>>, %arg4: memref<128x128xbf16, #tpu.memory_space<vmem>>, %arg5: memref<128x128xbf16, #tpu.memory_space<vmem>>, %arg6: memref<1x128xf32, #tpu.memory_space<vmem>>, %arg7: memref<128x128xbf16, #tpu.memory_space<vmem>>, %arg8: memref<1x128xf32, #tpu.memory_space<vmem>>, %arg9: memref<2x128xf32, #tpu.memory_space<vmem>>) attributes {dimension_semantics = [#tpu.dimension_semantics<parallel>], iteration_bounds = array<i64: 1>, scalar_prefetch = 0 : i64, scratch_operands = 0 : i64, tpu.core_type = #tpu.core_type<tc>, window_params = [{transform_indices = @transform_0, window_bounds = array<i64: 2, 128>}, {transform_indices = @transform_1, window_bounds = array<i64: 2, 1>}, {pipeline_mode = #tpu.pipeline_mode<synchronous>, transform_indices = @transform_2, window_bounds = array<i64: 128, 128>}, {pipeline_mode = #tpu.pipeline_mode<synchronous>, transform_indices = @transform_3, window_bounds = array<i64: 128, 128>}, {pipeline_mode = #tpu.pipeline_mode<synchronous>, transform_indices = @transform_4, window_bounds = array<i64: 128, 128>}, {pipeline_mode = #tpu.pipeline_mode<synchronous>, transform_indices = @transform_5, window_bounds = array<i64: 1, 128>}, {pipeline_mode = #tpu.pipeline_mode<synchronous>, transform_indices = @transform_6, window_bounds = array<i64: 128, 128>}, {pipeline_mode = #tpu.pipeline_mode<synchronous>, transform_indices = @transform_7, window_bounds = array<i64: 1, 128>}, {transform_indices = @transform_8, window_bounds = array<i64: 2, 128>}]} {
    %c0 = arith.constant 0 : index
    %c0_0 = arith.constant 0 : index
    %0 = vector.load %arg1[%c0, %c0_0] : memref<2x128xf32, #tpu.memory_space<vmem>>, vector<2x128xf32>
    %1 = arith.mulf %0, %0 : vector<2x128xf32>
    %cst = arith.constant dense<0.000000e+00> : vector<2xf32>
    %2 = vector.multi_reduction <add>, %1, %cst [1] : vector<2x128xf32> to vector<2xf32>
    %3 = vector.shape_cast %2 : vector<2xf32> to vector<2x1xf32>
    %cst_1 = arith.constant 6.250000e-02 : f32
    %4 = vector.broadcast %cst_1 : f32 to vector<2x1xf32>
    %5 = arith.mulf %3, %4 : vector<2x1xf32>
    %cst_2 = arith.constant 9.99999993E-9 : f32
    %6 = vector.broadcast %cst_2 : f32 to vector<2x1xf32>
    %7 = arith.addf %5, %6 : vector<2x1xf32>
    %8 = math.rsqrt %7 : vector<2x1xf32>
    %9 = vector.broadcast %8 : vector<2x1xf32> to vector<2x128xf32>
    %10 = arith.mulf %0, %9 : vector<2x128xf32>
    %c0_3 = arith.constant 0 : index
    %c0_4 = arith.constant 0 : index
    %11 = vector.load %arg2[%c0_3, %c0_4] : memref<2x1xi32, #tpu.memory_space<vmem>>, vector<2x1xi32>
    %12 = tpu.iota {dimensions = array<i32: 1>} : vector<2x128xi32>
    %13 = vector.broadcast %11 : vector<2x1xi32> to vector<2x128xi32>
    %14 = arith.cmpi eq, %12, %13 : vector<2x128xi32>
    %15 = arith.extui %14 : vector<2x128xi1> to vector<2x128xi32>
    %16 = arith.sitofp %15 : vector<2x128xi32> to vector<2x128xf32>
    %c0_5 = arith.constant 0 : index
    %c0_6 = arith.constant 0 : index
    %17 = vector.load %arg3[%c0_5, %c0_6] : memref<128x128xf32, #tpu.memory_space<vmem>>, vector<128x128xf32>
    %cst_7 = arith.constant dense<0.000000e+00> : vector<2x128xf32>
    %18 = tpu.matmul %16, %17, %cst_7 {dimension_numbers = #tpu.dot_dimension_numbers<[1], [0], [0], [1], [0, 0, 1, 1], [], []>} : vector<2x128xf32>, vector<128x128xf32>, vector<2x128xf32> -> vector<2x128xf32>
    %19 = arith.mulf %18, %18 : vector<2x128xf32>
    %cst_8 = arith.constant dense<0.000000e+00> : vector<2xf32>
    %20 = vector.multi_reduction <add>, %19, %cst_8 [1] : vector<2x128xf32> to vector<2xf32>
    %21 = vector.shape_cast %20 : vector<2xf32> to vector<2x1xf32>
    %cst_9 = arith.constant 3.125000e-02 : f32
    %22 = vector.broadcast %cst_9 : f32 to vector<2x1xf32>
    %23 = arith.mulf %21, %22 : vector<2x1xf32>
    %cst_10 = arith.constant 9.99999993E-9 : f32
    %24 = vector.broadcast %cst_10 : f32 to vector<2x1xf32>
    %25 = arith.addf %23, %24 : vector<2x1xf32>
    %26 = math.rsqrt %25 : vector<2x1xf32>
    %27 = vector.broadcast %26 : vector<2x1xf32> to vector<2x128xf32>
    %28 = arith.mulf %18, %27 : vector<2x128xf32>
    %29 = arith.truncf %10 : vector<2x128xf32> to vector<2x128xbf16>
    %c0_11 = arith.constant 0 : index
    %c0_12 = arith.constant 0 : index
    %30 = vector.load %arg4[%c0_11, %c0_12] : memref<128x128xbf16, #tpu.memory_space<vmem>>, vector<128x128xbf16>
    %cst_13 = arith.constant dense<0.000000e+00> : vector<2x128xf32>
    %31 = tpu.matmul %29, %30, %cst_13 {dimension_numbers = #tpu.dot_dimension_numbers<[1], [0], [0], [1], [0, 0, 1, 1], [], []>} : vector<2x128xbf16>, vector<128x128xbf16>, vector<2x128xf32> -> vector<2x128xf32>
    %32 = arith.truncf %28 : vector<2x128xf32> to vector<2x128xbf16>
    %c0_14 = arith.constant 0 : index
    %c0_15 = arith.constant 0 : index
    %33 = vector.load %arg5[%c0_14, %c0_15] : memref<128x128xbf16, #tpu.memory_space<vmem>>, vector<128x128xbf16>
    %cst_16 = arith.constant dense<0.000000e+00> : vector<2x128xf32>
    %34 = tpu.matmul %32, %33, %cst_16 {dimension_numbers = #tpu.dot_dimension_numbers<[1], [0], [0], [1], [0, 0, 1, 1], [], []>} : vector<2x128xbf16>, vector<128x128xbf16>, vector<2x128xf32> -> vector<2x128xf32>
    %35 = arith.addf %31, %34 : vector<2x128xf32>
    %c0_17 = arith.constant 0 : index
    %c0_18 = arith.constant 0 : index
    %36 = vector.load %arg6[%c0_17, %c0_18] : memref<1x128xf32, #tpu.memory_space<vmem>>, vector<1x128xf32>
    %37 = vector.broadcast %36 : vector<1x128xf32> to vector<2x128xf32>
    %38 = arith.addf %35, %37 : vector<2x128xf32>
    %cst_19 = arith.constant 2.000000e-01 : f32
    %39 = vector.broadcast %cst_19 : f32 to vector<2x128xf32>
    %40 = arith.mulf %39, %38 : vector<2x128xf32>
    %41 = arith.maximumf %38, %40 : vector<2x128xf32>
    %42 = arith.truncf %41 : vector<2x128xf32> to vector<2x128xbf16>
    %c0_20 = arith.constant 0 : index
    %c0_21 = arith.constant 0 : index
    %43 = vector.load %arg7[%c0_20, %c0_21] : memref<128x128xbf16, #tpu.memory_space<vmem>>, vector<128x128xbf16>
    %cst_22 = arith.constant dense<0.000000e+00> : vector<2x128xf32>
    %44 = tpu.matmul %42, %43, %cst_22 {dimension_numbers = #tpu.dot_dimension_numbers<[1], [0], [0], [1], [0, 0, 1, 1], [], []>} : vector<2x128xbf16>, vector<128x128xbf16>, vector<2x128xf32> -> vector<2x128xf32>
    %c0_23 = arith.constant 0 : index
    %c0_24 = arith.constant 0 : index
    %45 = vector.load %arg8[%c0_23, %c0_24] : memref<1x128xf32, #tpu.memory_space<vmem>>, vector<1x128xf32>
    %46 = vector.broadcast %45 : vector<1x128xf32> to vector<2x128xf32>
    %47 = arith.addf %44, %46 : vector<2x128xf32>
    %cst_25 = arith.constant 2.000000e-01 : f32
    %48 = vector.broadcast %cst_25 : f32 to vector<2x128xf32>
    %49 = arith.mulf %48, %47 : vector<2x128xf32>
    %50 = arith.maximumf %47, %49 : vector<2x128xf32>
    %c0_26 = arith.constant 0 : index
    %c0_27 = arith.constant 0 : index
    %51 = vector.load %arg9[%c0_26, %c0_27] : memref<2x128xf32, #tpu.memory_space<vmem>>, vector<2x128xf32>
    tpu.vector_store %arg9[%c0_26, %c0_27], %50 {strides = array<i32>} : memref<2x128xf32, #tpu.memory_space<vmem>>, vector<2x128xf32>,
    return
  }
  func.func @transform_0(%arg0: i32) -> (i32, i32) {
    %c0_i32 = arith.constant 0 : i32
    %c0_i32_0 = arith.constant 0 : i32
    return %arg0, %c0_i32 : i32, i32
  }
  func.func @transform_1(%arg0: i32) -> (i32, i32) {
    %c0_i32 = arith.constant 0 : i32
    %c0_i32_0 = arith.constant 0 : i32
    return %arg0, %c0_i32 : i32, i32
  }
  func.func @transform_2(%arg0: i32) -> (i32, i32) {
    %c0_i32 = arith.constant 0 : i32
    %c0_i32_0 = arith.constant 0 : i32
    %c0_i32_1 = arith.constant 0 : i32
    return %c0_i32, %c0_i32_0 : i32, i32
  }
  func.func @transform_3(%arg0: i32) -> (i32, i32) {
    %c0_i32 = arith.constant 0 : i32
    %c0_i32_0 = arith.constant 0 : i32
    %c0_i32_1 = arith.constant 0 : i32
    return %c0_i32, %c0_i32_0 : i32, i32
  }
  func.func @transform_4(%arg0: i32) -> (i32, i32) {
    %c0_i32 = arith.constant 0 : i32
    %c0_i32_0 = arith.constant 0 : i32
    %c0_i32_1 = arith.constant 0 : i32
    return %c0_i32, %c0_i32_0 : i32, i32
  }
  func.func @transform_5(%arg0: i32) -> (i32, i32) {
    %c0_i32 = arith.constant 0 : i32
    %c0_i32_0 = arith.constant 0 : i32
    %c0_i32_1 = arith.constant 0 : i32
    return %c0_i32, %c0_i32_0 : i32, i32
  }
  func.func @transform_6(%arg0: i32) -> (i32, i32) {
    %c0_i32 = arith.constant 0 : i32
    %c0_i32_0 = arith.constant 0 : i32
    %c0_i32_1 = arith.constant 0 : i32
    return %c0_i32, %c0_i32_0 : i32, i32
  }
  func.func @transform_7(%arg0: i32) -> (i32, i32) {
    %c0_i32 = arith.constant 0 : i32
    %c0_i32_0 = arith.constant 0 : i32
    %c0_i32_1 = arith.constant 0 : i32
    return %c0_i32, %c0_i32_0 : i32, i32
  }
  func.func @transform_8(%arg0: i32) -> (i32, i32) {
    %c0_i32 = arith.constant 0 : i32
    %c0_i32_0 = arith.constant 0 : i32
    return %arg0, %c0_i32 : i32, i32
  }
}

</mosaic_0001>

<llo_original>
// kernel: _lambda_.1
$region0: #{_lambda_.1}
  #allocation0 [shape = 'u32[]', space=smem, size = 0x4, offset = 0x4, fixed_abs, tag = 'smem constant byte address 0x4 - core index']
  #allocation1 [shape = 'u32[144,128]{1,0:T(1,128)}', space=vmem, size = 0x12000, scoped, tag = 'internal scratch']
  %s0 = inlined_call_operand.vmem [shape: f32[2,128], index: 0, kind: input, shape index: {}]
  %s1 = inlined_call_operand.vmem [shape: s32[2,1], index: 1, kind: input, shape index: {}]
  %s2 = inlined_call_operand.hbm [shape: f32[128,128], index: 2, kind: input, shape index: {}]
  %s3 = inlined_call_operand.hbm [shape: bf16[128,128], index: 3, kind: input, shape index: {}]
  %s4 = inlined_call_operand.hbm [shape: bf16[128,128], index: 4, kind: input, shape index: {}]
  %s5 = inlined_call_operand.vmem [shape: f32[1,128], index: 5, kind: input, shape index: {}, may-alias: {5,7}]
  %s6 = inlined_call_operand.hbm [shape: bf16[128,128], index: 6, kind: input, shape index: {}]
  %s7 = inlined_call_operand.vmem [shape: f32[1,128], index: 7, kind: input, shape index: {}, may-alias: {5,7}]
  %s8 = inlined_call_operand.vmem [shape: f32[2,128], index: 8, kind: output, shape index: {}]
  %s9 = sld [smem:[#allocation0]]
  $region58: #{_lambda_.1} parent=0
    _
  %s11 = ssub.s32 1, %s9
  %s12 = scalar_select 0, %s11, %s9
  $region1: #{_lambda_.1} parent=0
    #allocation2 [shape = 'u8[65536]{0}', space=vmem, size = 0x10000, scoped, tag = 'input window, operand 2, single buffered']
    #allocation3 [shape = 's32[1]{0}', space=sflag, size = 0x4, scoped, tag = 'scoped memory for _lambda_.1']
    #allocation4 [shape = 'u8[32768]{0}', space=vmem, size = 0x8000, scoped, tag = 'input window, operand 3, single buffered']
    #allocation5 [shape = 's32[1]{0}', space=sflag, size = 0x4, scoped, tag = 'scoped memory for _lambda_.1']
    #allocation6 [shape = 'u8[32768]{0}', space=vmem, size = 0x8000, scoped, tag = 'input window, operand 4, single buffered']
    #allocation7 [shape = 'u8[32768]{0}', space=vmem, size = 0x8000, scoped, tag = 'input window, operand 6, single buffered']
    #allocation8 [shape = 's32[1]{0}', space=sflag, size = 0x4, scoped, tag = 'scoped memory for _lambda_.1']
    %13 = vsyncpa [#allocation3], 0
    %14 = vsyncpa [#allocation5], 0
    %15 = vsyncpa [#allocation8], 0
    // Predicated region
    $region2: #{_lambda_.1} parent=1 // pred_check
      _
    $region3: #{_lambda_.1} parent=1 // pred_check_branch
      %17 = sbr.rel (0) target = $region5
    $region4: #{_lambda_.1} parent=1 // pred_region
      _
    $region5: #{_lambda_.1} parent=1 // pred_fallthru
      _
    // Predicated region
    $region6: #{_lambda_.1} parent=1 // pred_check
      _
    $region7: #{_lambda_.1} parent=1 // pred_check_branch
      %19 = sbr.rel (0) target = $region9
    $region8: #{_lambda_.1} parent=1 // pred_region
      _
    $region9: #{_lambda_.1} parent=1 // pred_fallthru
      _
    // Predicated region
    $region10: #{_lambda_.1} parent=1 // pred_check
      _
    $region11: #{_lambda_.1} parent=1 // pred_check_branch
      %21 = sbr.rel (0) target = $region13
    $region12: #{_lambda_.1} parent=1 // pred_region
      %s23 = ssub.s32 2048, 2048
      %24 = vsyncadd [#allocation3], %s23
      %s25 = sshll.u32 [#allocation2], 4
      %s26 = int_to_ptr.vmem [resolvable:$true] %s25
      %31 = dma.hbm_to_vmem [thread:$0]  %s2, 2048, %s26, [#allocation3], 128, 128, 8
    $region13: #{_lambda_.1} parent=1 // pred_fallthru
      _
    // Predicated region
    $region14: #{_lambda_.1} parent=1 // pred_check
      _
    $region15: #{_lambda_.1} parent=1 // pred_check_branch
      %33 = sbr.rel (0) target = $region17
    $region16: #{_lambda_.1} parent=1 // pred_region
      %s35 = ssub.s32 1024, 1024
      %36 = vsyncadd [#allocation5], %s35
      %s37 = sshll.u32 [#allocation4], 4
      %s38 = int_to_ptr.vmem [resolvable:$true] %s37
      %43 = dma.hbm_to_vmem [thread:$0]  %s3, 1024, %s38, [#allocation5], 64, 64, 4
    $region17: #{_lambda_.1} parent=1 // pred_fallthru
      _
    // Predicated region
    $region18: #{_lambda_.1} parent=1 // pred_check
      _
    $region19: #{_lambda_.1} parent=1 // pred_check_branch
      %45 = sbr.rel (0) target = $region21
    $region20: #{_lambda_.1} parent=1 // pred_region
      %s47 = ssub.s32 1024, 1024
      %48 = vsyncadd [#allocation5], %s47
      %s49 = sshll.u32 [#allocation6], 4
      %s50 = int_to_ptr.vmem [resolvable:$true] %s49
      %55 = dma.hbm_to_vmem [thread:$0]  %s4, 1024, %s50, [#allocation5], 64, 64, 4
    $region21: #{_lambda_.1} parent=1 // pred_fallthru
      _
    // Predicated region
    $region22: #{_lambda_.1} parent=1 // pred_check
      _
    $region23: #{_lambda_.1} parent=1 // pred_check_branch
      %57 = sbr.rel (0) target = $region25
    $region24: #{_lambda_.1} parent=1 // pred_region
      _
    $region25: #{_lambda_.1} parent=1 // pred_fallthru
      _
    // Predicated region
    $region26: #{_lambda_.1} parent=1 // pred_check
      _
    $region27: #{_lambda_.1} parent=1 // pred_check_branch
      %59 = sbr.rel (0) target = $region29
    $region28: #{_lambda_.1} parent=1 // pred_region
      %s61 = ssub.s32 1024, 1024
      %62 = vsyncadd [#allocation8], %s61
      %s63 = sshll.u32 [#allocation7], 4
      %s64 = int_to_ptr.vmem [resolvable:$true] %s63
      %69 = dma.hbm_to_vmem [thread:$0]  %s6, 1024, %s64, [#allocation8], 64, 64, 4
    $region29: #{_lambda_.1} parent=1 // pred_fallthru
      _
    // Predicated region
    $region30: #{_lambda_.1} parent=1 // pred_check
      _
    $region31: #{_lambda_.1} parent=1 // pred_check_branch
      %71 = sbr.rel (0) target = $region33
    $region32: #{_lambda_.1} parent=1 // pred_region
      _
    $region33: #{_lambda_.1} parent=1 // pred_fallthru
      _
    // Predicated region
    $region34: #{_lambda_.1} parent=1 // pred_check
      _
    $region35: #{_lambda_.1} parent=1 // pred_check_branch
      %73 = sbr.rel (0) target = $region37
    $region36: #{_lambda_.1} parent=1 // pred_region
      %74 = dma.done [#allocation3], 2048
    $region37: #{_lambda_.1} parent=1 // pred_fallthru
      _
    // Predicated region
    $region38: #{_lambda_.1} parent=1 // pred_check
      _
    $region39: #{_lambda_.1} parent=1 // pred_check_branch
      %76 = sbr.rel (0) target = $region41
    $region40: #{_lambda_.1} parent=1 // pred_region
      %77 = dma.done [#allocation5], 1024
    $region41: #{_lambda_.1} parent=1 // pred_fallthru
      _
    // Predicated region
    $region42: #{_lambda_.1} parent=1 // pred_check
      _
    $region43: #{_lambda_.1} parent=1 // pred_check_branch
      %79 = sbr.rel (0) target = $region45
    $region44: #{_lambda_.1} parent=1 // pred_region
      %80 = dma.done [#allocation5], 1024
    $region45: #{_lambda_.1} parent=1 // pred_fallthru
      _
    // Predicated region
    $region46: #{_lambda_.1} parent=1 // pred_check
      _
    $region47: #{_lambda_.1} parent=1 // pred_check_branch
      %82 = sbr.rel (0) target = $region49
    $region48: #{_lambda_.1} parent=1 // pred_region
      %83 = dma.done [#allocation8], 1024
    $region49: #{_lambda_.1} parent=1 // pred_fallthru
      _
    %v85 = vld [vmem:[%s0] sm:$0x3]
    %v86 = vmul.f32 %v85, %v85
    %vm87 = vcmask 1041408
    %v88 = vsel %vm87, %v86, 0.0
    %89 = vadd.xlane.f32.xlu0 %v88
    %v90 = vpop.xlane.xlu0 %89
    %v91 = vmul.f32 %v90, 0.0625
    %v92 = vadd.f32 %v91, 1e-08
    %v93 = vrsqrt.pop %v92
    %v94 = vmul.f32 %v85, %v93
    %v95 = vld [vmem:[%s1] sm:$0x3]
    %v96 = vlaneseq
    %v97 = vand.u32 %v96, 127
    %98 = vset.pattern.permute.xlu0 0
    %99 = vperm.xlu0 %98, %v95
    %v100 = vpop.permute.xlu0 %99
    %vm101 = vcmp.eq.s32.totalorder %v97, %v100
    %v102 = vsel %vm101, 1, 0
    %v103 = vcvt.s32.f32 %v102
    %v104 = vld [vmem:[#allocation2] sm:$0xff]
    %v105 = vld [vmem:[#allocation2 + $0x8] sm:$0xff]
    %v106 = vld [vmem:[#allocation2 + $0x10] sm:$0xff]
    %v107 = vld [vmem:[#allocation2 + $0x18] sm:$0xff]
    %v108 = vld [vmem:[#allocation2 + $0x20] sm:$0xff]
    %v109 = vld [vmem:[#allocation2 + $0x28] sm:$0xff]
    %v110 = vld [vmem:[#allocation2 + $0x30] sm:$0xff]
    %v111 = vld [vmem:[#allocation2 + $0x38] sm:$0xff]
    %v112 = vld [vmem:[#allocation2 + $0x40] sm:$0xff]
    %v113 = vld [vmem:[#allocation2 + $0x48] sm:$0xff]
    %v114 = vld [vmem:[#allocation2 + $0x50] sm:$0xff]
    %v115 = vld [vmem:[#allocation2 + $0x58] sm:$0xff]
    %v116 = vld [vmem:[#allocation2 + $0x60] sm:$0xff]
    %v117 = vld [vmem:[#allocation2 + $0x68] sm:$0xff]
    %v118 = vld [vmem:[#allocation2 + $0x70] sm:$0xff]
    %v119 = vld [vmem:[#allocation2 + $0x78] sm:$0xff]
    %120 = vmatprep.subr.mxu0 0.0
    %121 = vmatpush1.msra.mxu0 %v104
    %122 = vmatprep.subr.mxu0 0.0
    %123 = vmatpush1.msra.mxu0 %v105
    %124 = vmatprep.subr.mxu0 0.0
    %125 = vmatpush1.msra.mxu0 %v106
    %126 = vmatprep.subr.mxu0 0.0
    %127 = vmatpush1.msra.mxu0 %v107
    %128 = vmatprep.subr.mxu0 0.0
    %129 = vmatpush1.msra.mxu0 %v108
    %130 = vmatprep.subr.mxu0 0.0
    %131 = vmatpush1.msra.mxu0 %v109
    %132 = vmatprep.subr.mxu0 0.0
    %133 = vmatpush1.msra.mxu0 %v110
    %134 = vmatprep.subr.mxu0 0.0
    %135 = vmatpush1.msra.mxu0 %v111
    %136 = vmatprep.subr.mxu0 0.0
    %137 = vmatpush1.msra.mxu0 %v112
    %138 = vmatprep.subr.mxu0 0.0
    %139 = vmatpush1.msra.mxu0 %v113
    %140 = vmatprep.subr.mxu0 0.0
    %141 = vmatpush1.msra.mxu0 %v114
    %142 = vmatprep.subr.mxu0 0.0
    %143 = vmatpush1.msra.mxu0 %v115
    %144 = vmatprep.subr.mxu0 0.0
    %145 = vmatpush1.msra.mxu0 %v116
    %146 = vmatprep.subr.mxu0 0.0
    %147 = vmatpush1.msra.mxu0 %v117
    %148 = vmatprep.subr.mxu0 0.0
    %149 = vmatpush1.msra.mxu0 %v118
    %150 = vmatprep.subr.mxu0 0.0
    %151 = vmatpush1.msra.mxu0 %v119
    %152 = vmatprep.subr.mxu0 0.0
    %153 = vmatpush1.msra.mxu0 0.0
    %154 = vmatprep.subr.mxu0 0.0
    %155 = vmatpush1.msra.mxu0 0.0
    %156 = vmatprep.subr.mxu0 0.0
    %157 = vmatpush1.msra.mxu0 0.0
    %158 = vmatprep.subr.mxu0 0.0
    %159 = vmatpush1.msra.mxu0 0.0
    %160 = vmatprep.subr.mxu0 0.0
    %161 = vmatpush1.msra.mxu0 0.0
    %162 = vmatprep.subr.mxu0 0.0
    %163 = vmatpush1.msra.mxu0 0.0
    %164 = vmatprep.subr.mxu0 0.0
    %165 = vmatpush1.msra.mxu0 0.0
    %166 = vmatprep.subr.mxu0 0.0
    %167 = vmatpush1.msra.mxu0 0.0
    %168 = vmatprep.subr.mxu0 0.0
    %169 = vmatpush1.msra.mxu0 0.0
    %170 = vmatprep.subr.mxu0 0.0
    %171 = vmatpush1.msra.mxu0 0.0
    %172 = vmatprep.subr.mxu0 0.0
    %173 = vmatpush1.msra.mxu0 0.0
    %174 = vmatprep.subr.mxu0 0.0
    %175 = vmatpush1.msra.mxu0 0.0
    %176 = vmatprep.subr.mxu0 0.0
    %177 = vmatpush1.msra.mxu0 0.0
    %178 = vmatprep.subr.mxu0 0.0
    %179 = vmatpush1.msra.mxu0 0.0
    %180 = vmatprep.subr.mxu0 0.0
    %181 = vmatpush1.msra.mxu0 0.0
    %182 = vmatprep.subr.mxu0 0.0
    %183 = vmatpush1.msra.mxu0 0.0
    %184 = vmatprep.mubr.f32.mxu0 0.0
    %185 = vmatmul.mubr.f32.gmra.mrb[0].mxu0 %v103
    %v186 = vpop.f32.mrb[0].mxu0
    %v187 = vadd.f32 0.0, %v186
    %v188 = vpop.f32.mrb[0].mxu0
    %189 = vdwg.mxu0
    %v190 = vmul.f32 %v187, %v187
    %v191 = vsel %vm87, %v190, 0.0
    %192 = vadd.xlane.f32.xlu0 %v191
    %v193 = vpop.xlane.xlu0 %192
    %v194 = vmul.f32 %v193, 0.03125
    %v195 = vadd.f32 %v194, 1e-08
    %v196 = vrsqrt.pop %v195
    %v197 = vmul.f32 %v187, %v196
    %v198 = vpack.c.bf16 %v94, %v94
    %v199 = vld [vmem:[#allocation4] sm:$0xf]
    %v200 = vld [vmem:[#allocation4 + $0x4] sm:$0xf]
    %v201 = vld [vmem:[#allocation4 + $0x8] sm:$0xf]
    %v202 = vld [vmem:[#allocation4 + $0xc] sm:$0xf]
    %v203 = vld [vmem:[#allocation4 + $0x10] sm:$0xf]
    %v204 = vld [vmem:[#allocation4 + $0x14] sm:$0xf]
    %v205 = vld [vmem:[#allocation4 + $0x18] sm:$0xf]
    %v206 = vld [vmem:[#allocation4 + $0x1c] sm:$0xf]
    %v207 = vld [vmem:[#allocation4 + $0x20] sm:$0xf]
    %v208 = vld [vmem:[#allocation4 + $0x24] sm:$0xf]
    %v209 = vld [vmem:[#allocation4 + $0x28] sm:$0xf]
    %v210 = vld [vmem:[#allocation4 + $0x2c] sm:$0xf]
    %v211 = vld [vmem:[#allocation4 + $0x30] sm:$0xf]
    %v212 = vld [vmem:[#allocation4 + $0x34] sm:$0xf]
    %v213 = vld [vmem:[#allocation4 + $0x38] sm:$0xf]
    %v214 = vld [vmem:[#allocation4 + $0x3c] sm:$0xf]
    %v215 = vpack.c.bf16 %v197, %v197
    %v216 = vld [vmem:[#allocation6] sm:$0xf]
    %v217 = vld [vmem:[#allocation6 + $0x4] sm:$0xf]
    %v218 = vld [vmem:[#allocation6 + $0x8] sm:$0xf]
    %v219 = vld [vmem:[#allocation6 + $0xc] sm:$0xf]
    %v220 = vld [vmem:[#allocation6 + $0x10] sm:$0xf]
    %v221 = vld [vmem:[#allocation6 + $0x14] sm:$0xf]
    %v222 = vld [vmem:[#allocation6 + $0x18] sm:$0xf]
    %v223 = vld [vmem:[#allocation6 + $0x1c] sm:$0xf]
    %v224 = vld [vmem:[#allocation6 + $0x20] sm:$0xf]
    %v225 = vld [vmem:[#allocation6 + $0x24] sm:$0xf]
    %v226 = vld [vmem:[#allocation6 + $0x28] sm:$0xf]
    %v227 = vld [vmem:[#allocation6 + $0x2c] sm:$0xf]
    %v228 = vld [vmem:[#allocation6 + $0x30] sm:$0xf]
    %v229 = vld [vmem:[#allocation6 + $0x34] sm:$0xf]
    %v230 = vld [vmem:[#allocation6 + $0x38] sm:$0xf]
    %v231 = vld [vmem:[#allocation6 + $0x3c] sm:$0xf]
    %v248 = vunpack.c.l.b16 %v216
    %v249 = vunpack.c.l.b16 %v217
    %v250 = vunpack.c.l.b16 %v218
    %v251 = vunpack.c.l.b16 %v219
    %v252 = vunpack.c.l.b16 %v220
    %v253 = vunpack.c.l.b16 %v221
    %v254 = vunpack.c.l.b16 %v222
    %v255 = vunpack.c.l.b16 %v223
    %v256 = vunpack.c.l.b16 %v224
    %v257 = vunpack.c.l.b16 %v225
    %v258 = vunpack.c.l.b16 %v226
    %v259 = vunpack.c.l.b16 %v227
    %v260 = vunpack.c.l.b16 %v228
    %v261 = vunpack.c.l.b16 %v229
    %v262 = vunpack.c.l.b16 %v230
    %v263 = vunpack.c.l.b16 %v231
    %v264 = vpack.c.b16 %v249, %v248
    %v265 = vpack.c.b16 %v251, %v250
    %v266 = vpack.c.b16 %v253, %v252
    %v267 = vpack.c.b16 %v255, %v254
    %v268 = vpack.c.b16 %v257, %v256
    %v269 = vpack.c.b16 %v259, %v258
    %v270 = vpack.c.b16 %v261, %v260
    %v271 = vpack.c.b16 %v263, %v262
    %280 = vmatprep.subr.bf16.mxu0 0
    %281 = vmatpush1.bf16.msra.mxu0 %v264
    %282 = vmatprep.subr.bf16.mxu0 0
    %283 = vmatpush1.bf16.msra.mxu0 %v265
    %284 = vmatprep.subr.bf16.mxu0 0
    %285 = vmatpush1.bf16.msra.mxu0 %v266
    %286 = vmatprep.subr.bf16.mxu0 0
    %287 = vmatpush1.bf16.msra.mxu0 %v267
    %288 = vmatprep.subr.bf16.mxu0 0
    %289 = vmatpush1.bf16.msra.mxu0 %v268
    %290 = vmatprep.subr.bf16.mxu0 0
    %291 = vmatpush1.bf16.msra.mxu0 %v269
    %292 = vmatprep.subr.bf16.mxu0 0
    %293 = vmatpush1.bf16.msra.mxu0 %v270
    %294 = vmatprep.subr.bf16.mxu0 0
    %295 = vmatpush1.bf16.msra.mxu0 %v271
    %296 = vmatprep.subr.bf16.mxu0 0
    %297 = vmatpush1.bf16.msra.mxu0 0
    %298 = vmatprep.subr.bf16.mxu0 0
    %299 = vmatpush1.bf16.msra.mxu0 0
    %300 = vmatprep.subr.bf16.mxu0 0
    %301 = vmatpush1.bf16.msra.mxu0 0
    %302 = vmatprep.subr.bf16.mxu0 0
    %303 = vmatpush1.bf16.msra.mxu0 0
    %304 = vmatprep.subr.bf16.mxu0 0
    %305 = vmatpush1.bf16.msra.mxu0 0
    %306 = vmatprep.subr.bf16.mxu0 0
    %307 = vmatpush1.bf16.msra.mxu0 0
    %308 = vmatprep.subr.bf16.mxu0 0
    %309 = vmatpush1.bf16.msra.mxu0 0
    %310 = vmatprep.subr.bf16.mxu0 0
    %311 = vmatpush1.bf16.msra.mxu0 0
    %312 = vmatprep.mubr.bf16.mxu0 0
    %313 = vmatmul.mubr.bf16.gmra.mrb[0].mxu0 %v215
    %v314 = vpop.f32.mrb[0].mxu0
    %v315 = vadd.f32 0.0, %v314
    %v316 = vpop.f32.mrb[0].mxu0
    %v317 = vpop.f32.mrb[0].mxu0
    %v318 = vpop.f32.mrb[0].mxu0
    %319 = vdwg.mxu0
    %v336 = vunpack.c.l.b16 %v199
    %v337 = vunpack.c.l.b16 %v200
    %v338 = vunpack.c.l.b16 %v201
    %v339 = vunpack.c.l.b16 %v202
    %v340 = vunpack.c.l.b16 %v203
    %v341 = vunpack.c.l.b16 %v204
    %v342 = vunpack.c.l.b16 %v205
    %v343 = vunpack.c.l.b16 %v206
    %v344 = vunpack.c.l.b16 %v207
    %v345 = vunpack.c.l.b16 %v208
    %v346 = vunpack.c.l.b16 %v209
    %v347 = vunpack.c.l.b16 %v210
    %v348 = vunpack.c.l.b16 %v211
    %v349 = vunpack.c.l.b16 %v212
    %v350 = vunpack.c.l.b16 %v213
    %v351 = vunpack.c.l.b16 %v214
    %v352 = vpack.c.b16 %v337, %v336
    %v353 = vpack.c.b16 %v339, %v338
    %v354 = vpack.c.b16 %v341, %v340
    %v355 = vpack.c.b16 %v343, %v342
    %v356 = vpack.c.b16 %v345, %v344
    %v357 = vpack.c.b16 %v347, %v346
    %v358 = vpack.c.b16 %v349, %v348
    %v359 = vpack.c.b16 %v351, %v350
    %368 = vmatprep.subr.bf16.mxu0 0
    %369 = vmatpush1.bf16.msra.mxu0 %v352
    %370 = vmatprep.subr.bf16.mxu0 0
    %371 = vmatpush1.bf16.msra.mxu0 %v353
    %372 = vmatprep.subr.bf16.mxu0 0
    %373 = vmatpush1.bf16.msra.mxu0 %v354
    %374 = vmatprep.subr.bf16.mxu0 0
    %375 = vmatpush1.bf16.msra.mxu0 %v355
    %376 = vmatprep.subr.bf16.mxu0 0
    %377 = vmatpush1.bf16.msra.mxu0 %v356
    %378 = vmatprep.subr.bf16.mxu0 0
    %379 = vmatpush1.bf16.msra.mxu0 %v357
    %380 = vmatprep.subr.bf16.mxu0 0
    %381 = vmatpush1.bf16.msra.mxu0 %v358
    %382 = vmatprep.subr.bf16.mxu0 0
    %383 = vmatpush1.bf16.msra.mxu0 %v359
    %384 = vmatprep.subr.bf16.mxu0 0
    %385 = vmatpush1.bf16.msra.mxu0 0
    %386 = vmatprep.subr.bf16.mxu0 0
    %387 = vmatpush1.bf16.msra.mxu0 0
    %388 = vmatprep.subr.bf16.mxu0 0
    %389 = vmatpush1.bf16.msra.mxu0 0
    %390 = vmatprep.subr.bf16.mxu0 0
    %391 = vmatpush1.bf16.msra.mxu0 0
    %392 = vmatprep.subr.bf16.mxu0 0
    %393 = vmatpush1.bf16.msra.mxu0 0
    %394 = vmatprep.subr.bf16.mxu0 0
    %395 = vmatpush1.bf16.msra.mxu0 0
    %396 = vmatprep.subr.bf16.mxu0 0
    %397 = vmatpush1.bf16.msra.mxu0 0
    %398 = vmatprep.subr.bf16.mxu0 0
    %399 = vmatpush1.bf16.msra.mxu0 0
    %400 = vmatprep.mubr.bf16.mxu0 0
    %401 = vmatmul.mubr.bf16.gmra.mrb[0].mxu0 %v198
    %v402 = vpop.f32.mrb[0].mxu0
    %v403 = vadd.f32 %v315, %v402
    %v404 = vpop.f32.mrb[0].mxu0
    %v405 = vpop.f32.mrb[0].mxu0
    %v406 = vpop.f32.mrb[0].mxu0
    %407 = vdwg.mxu0
    %v408 = vld [vmem:[%s5] sm:$0x1]
    %v410 = vlaneseq
    %v411 = vshrl.u32 %v410, 7
    %v412 = vsub.s32 0, %v411
    %v413 = vrot.slane %v408, %v412
    %v415 = vadd.f32 %v403, %v413
    %v416 = vmul.f32 %v415, 0.2
    %v417 = vmax.f32 %v415, %v416
    %v418 = vpack.c.bf16 %v417, %v417
    %v419 = vld [vmem:[#allocation7] sm:$0xf]
    %v420 = vld [vmem:[#allocation7 + $0x4] sm:$0xf]
    %v421 = vld [vmem:[#allocation7 + $0x8] sm:$0xf]
    %v422 = vld [vmem:[#allocation7 + $0xc] sm:$0xf]
    %v423 = vld [vmem:[#allocation7 + $0x10] sm:$0xf]
    %v424 = vld [vmem:[#allocation7 + $0x14] sm:$0xf]
    %v425 = vld [vmem:[#allocation7 + $0x18] sm:$0xf]
    %v426 = vld [vmem:[#allocation7 + $0x1c] sm:$0xf]
    %v427 = vld [vmem:[#allocation7 + $0x20] sm:$0xf]
    %v428 = vld [vmem:[#allocation7 + $0x24] sm:$0xf]
    %v429 = vld [vmem:[#allocation7 + $0x28] sm:$0xf]
    %v430 = vld [vmem:[#allocation7 + $0x2c] sm:$0xf]
    %v431 = vld [vmem:[#allocation7 + $0x30] sm:$0xf]
    %v432 = vld [vmem:[#allocation7 + $0x34] sm:$0xf]
    %v433 = vld [vmem:[#allocation7 + $0x38] sm:$0xf]
    %v434 = vld [vmem:[#allocation7 + $0x3c] sm:$0xf]
    %v435 = vld [vmem:[%s7] sm:$0x1]
    %v437 = vlaneseq
    %v438 = vshrl.u32 %v437, 7
    %v439 = vsub.s32 0, %v438
    %v440 = vrot.slane %v435, %v439
    %v458 = vunpack.c.l.b16 %v419
    %v459 = vunpack.c.l.b16 %v420
    %v460 = vunpack.c.l.b16 %v421
    %v461 = vunpack.c.l.b16 %v422
    %v462 = vunpack.c.l.b16 %v423
    %v463 = vunpack.c.l.b16 %v424
    %v464 = vunpack.c.l.b16 %v425
    %v465 = vunpack.c.l.b16 %v426
    %v466 = vunpack.c.l.b16 %v427
    %v467 = vunpack.c.l.b16 %v428
    %v468 = vunpack.c.l.b16 %v429
    %v469 = vunpack.c.l.b16 %v430
    %v470 = vunpack.c.l.b16 %v431
    %v471 = vunpack.c.l.b16 %v432
    %v472 = vunpack.c.l.b16 %v433
    %v473 = vunpack.c.l.b16 %v434
    %v474 = vpack.c.b16 %v459, %v458
    %v475 = vpack.c.b16 %v461, %v460
    %v476 = vpack.c.b16 %v463, %v462
    %v477 = vpack.c.b16 %v465, %v464
    %v478 = vpack.c.b16 %v467, %v466
    %v479 = vpack.c.b16 %v469, %v468
    %v480 = vpack.c.b16 %v471, %v470
    %v481 = vpack.c.b16 %v473, %v472
    %490 = vmatprep.subr.bf16.mxu0 0
    %491 = vmatpush1.bf16.msra.mxu0 %v474
    %492 = vmatprep.subr.bf16.mxu0 0
    %493 = vmatpush1.bf16.msra.mxu0 %v475
    %494 = vmatprep.subr.bf16.mxu0 0
    %495 = vmatpush1.bf16.msra.mxu0 %v476
    %496 = vmatprep.subr.bf16.mxu0 0
    %497 = vmatpush1.bf16.msra.mxu0 %v477
    %498 = vmatprep.subr.bf16.mxu0 0
    %499 = vmatpush1.bf16.msra.mxu0 %v478
    %500 = vmatprep.subr.bf16.mxu0 0
    %501 = vmatpush1.bf16.msra.mxu0 %v479
    %502 = vmatprep.subr.bf16.mxu0 0
    %503 = vmatpush1.bf16.msra.mxu0 %v480
    %504 = vmatprep.subr.bf16.mxu0 0
    %505 = vmatpush1.bf16.msra.mxu0 %v481
    %506 = vmatprep.subr.bf16.mxu0 0
    %507 = vmatpush1.bf16.msra.mxu0 0
    %508 = vmatprep.subr.bf16.mxu0 0
    %509 = vmatpush1.bf16.msra.mxu0 0
    %510 = vmatprep.subr.bf16.mxu0 0
    %511 = vmatpush1.bf16.msra.mxu0 0
    %512 = vmatprep.subr.bf16.mxu0 0
    %513 = vmatpush1.bf16.msra.mxu0 0
    %514 = vmatprep.subr.bf16.mxu0 0
    %515 = vmatpush1.bf16.msra.mxu0 0
    %516 = vmatprep.subr.bf16.mxu0 0
    %517 = vmatpush1.bf16.msra.mxu0 0
    %518 = vmatprep.subr.bf16.mxu0 0
    %519 = vmatpush1.bf16.msra.mxu0 0
    %520 = vmatprep.subr.bf16.mxu0 0
    %521 = vmatpush1.bf16.msra.mxu0 0
    %522 = vmatprep.mubr.bf16.mxu0 0
    %523 = vmatmul.mubr.bf16.gmra.mrb[0].mxu0 %v418
    %v524 = vpop.f32.mrb[0].mxu0
    %v525 = vadd.f32 %v440, %v524
    %v526 = vpop.f32.mrb[0].mxu0
    %v527 = vpop.f32.mrb[0].mxu0
    %v528 = vpop.f32.mrb[0].mxu0
    %529 = vdwg.mxu0
    %v530 = vmul.f32 %v525, 0.2
    %v531 = vmax.f32 %v525, %v530
    %532 = vst [vmem:[%s8] sm:$0x3] %v531
    // Predicated region
    $region50: #{_lambda_.1} parent=1 // pred_check
      _
    $region51: #{_lambda_.1} parent=1 // pred_check_branch
      %534 = sbr.rel (0) target = $region53
    $region52: #{_lambda_.1} parent=1 // pred_region
      _
    $region53: #{_lambda_.1} parent=1 // pred_fallthru
      _
    // Predicated region
    $region54: #{_lambda_.1} parent=1 // pred_check
      _
    $region55: #{_lambda_.1} parent=1 // pred_check_branch
      %536 = sbr.rel (0) target = $region57
    $region56: #{_lambda_.1} parent=1 // pred_region
      _
    $region57: #{_lambda_.1} parent=1 // pred_fallthru
      _
    %537 = vsyncpa [#allocation3], 1
    %538 = vsyncpa [#allocation5], 1
    %539 = vsyncpa [#allocation8], 1

</llo_original>
